<compile_context>
chip_gen: v7x
topology: tpu7x:2x2x1
jax: 0.10.0
libtpu: 0.0.40
codegen_flags: <defaults>
</compile_context>

<pallas_src>
import math

import jax
import jax.numpy as jnp
from jax.experimental import pallas as pl
from jax.experimental.pallas import tpu as pltpu


def gcn_conv_kernel(gw_ref, wg_ref, x_ref, o_ref):
    graph = gw_ref[0]                                   # (3, N, N) f32
    wf = gw_ref[1]                                      # (3, N, N) f32

    # softmax over the fusion axis (size 3), max-stabilized in f32
    m = jnp.max(wf, axis=0, keepdims=True)
    e = jnp.exp(wf - m)
    sm = e / jnp.sum(e, axis=0, keepdims=True)          # (3, N, N)

    # fused adjacency: (graph * softmax(wf, 0)).sum(0) -> (N, N)
    fusion = jnp.sum(graph * sm, axis=0)

    # fusion @ weight_gcn -> (N, N)  (tiny MXU op, serial with the next dot)
    fg = jnp.dot(fusion, wg_ref[...], preferred_element_type=jnp.float32)

    # (N, N) @ (N, B*H): one dense 2-D MXU dot; lane-dense output store.
    o_ref[...] = jnp.dot(fg, x_ref[...],
                         preferred_element_type=jnp.float32).astype(o_ref.dtype)


@jax.jit
def gcn_conv(x, graph, weight_fusion, weight_gcn):
    B, N, H = x.shape
    assert graph.shape == (3, N, N)
    assert weight_fusion.shape == (3, N, N)
    assert weight_gcn.shape == (N, N)

    # Pack the two (3, N, N) operands into a single input (one DMA, not two).
    gw = jnp.stack([graph, weight_fusion]).astype(jnp.float32)      # (2, 3, N, N)
    # Lane-dense layout for the second matmul: (B, N, H) -> (N, B*H).
    x2 = jnp.transpose(x, (1, 0, 2)).reshape(N, B * H)

    out2 = pl.pallas_call(
        gcn_conv_kernel,
        out_shape=jax.ShapeDtypeStruct((N, B * H), x.dtype),
        in_specs=[
            pl.BlockSpec(memory_space=pltpu.MemorySpace.VMEM),   # packed graph + weight_fusion
            pl.BlockSpec(memory_space=pltpu.MemorySpace.VMEM),   # weight_gcn
            pl.BlockSpec(memory_space=pltpu.MemorySpace.VMEM),   # x (lane-dense)
        ],
        out_specs=pl.BlockSpec(memory_space=pltpu.MemorySpace.VMEM),
    )(gw, weight_gcn, x2)

    # Back to (B, N, H) to match the PyTorch module's output layout.
    return out2.reshape(N, B, H).transpose(1, 0, 2)


def glorot(key, shape):
    # torch_geometric glorot: uniform(-s, s), s = sqrt(6 / (size(-2) + size(-1)))
    s = math.sqrt(6.0 / (shape[-2] + shape[-1]))
    return jax.random.uniform(key, shape, jnp.float32, minval=-s, maxval=s)


def reference(x, graph, weight_fusion, weight_gcn):
    sm = jax.nn.softmax(weight_fusion, axis=0)
    fusion = jnp.sum(graph * sm, axis=0)
    return jnp.einsum("ij,bjh->bih", fusion @ weight_gcn, x)


if __name__ == "__main__":
    station_num = 16   # N
    batch = 2          # B
    hidden = 32        # H (per-station feature width)

    key = jax.random.PRNGKey(0)
    k_wf, k_wg, k_g, k_x = jax.random.split(key, 4)

    weight_fusion = glorot(k_wf, (3, station_num, station_num))
    weight_gcn = glorot(k_wg, (station_num, station_num))
    graph = jax.random.uniform(k_g, (3, station_num, station_num), jnp.float32)
    x = jax.random.normal(k_x, (batch, station_num, hidden), jnp.float32)

    out = gcn_conv(x, graph, weight_fusion, weight_gcn)
    out = jax.block_until_ready(out)

    ref = reference(x, graph, weight_fusion, weight_gcn)
    assert out.shape == (batch, station_num, hidden)
    assert jnp.allclose(out, ref, atol=1e-4, rtol=1e-4), "mismatch vs reference"

    print("KERNEL_OK")
</pallas_src>

<mosaic_0001>
module attributes {stable_mosaic.version = 11 : i64} {
  func.func @gcn_conv_kernel(%arg0: memref<2x3x16x16xf32, #tpu.memory_space<vmem>>, %arg1: memref<16x16xf32, #tpu.memory_space<vmem>>, %arg2: memref<16x64xf32, #tpu.memory_space<vmem>>, %arg3: memref<16x64xf32, #tpu.memory_space<vmem>>) attributes {dimension_semantics = [], scalar_prefetch = 0 : i64, scratch_operands = 0 : i64, tpu.core_type = #tpu.core_type<tc>} {
    %c0 = arith.constant 0 : index
    %c0_0 = arith.constant 0 : index
    %c0_1 = arith.constant 0 : index
    %c0_2 = arith.constant 0 : index
    %0 = vector.load %arg0[%c0, %c0_0, %c0_1, %c0_2] : memref<2x3x16x16xf32, #tpu.memory_space<vmem>>, vector<1x3x16x16xf32>
    %1 = vector.shape_cast %0 : vector<1x3x16x16xf32> to vector<3x16x16xf32>
    %c1 = arith.constant 1 : index
    %c0_3 = arith.constant 0 : index
    %c0_4 = arith.constant 0 : index
    %c0_5 = arith.constant 0 : index
    %2 = vector.load %arg0[%c1, %c0_3, %c0_4, %c0_5] : memref<2x3x16x16xf32, #tpu.memory_space<vmem>>, vector<1x3x16x16xf32>
    %3 = vector.shape_cast %2 : vector<1x3x16x16xf32> to vector<3x16x16xf32>
    %cst = arith.constant dense<0xFF800000> : vector<16x16xf32>
    %4 = vector.multi_reduction <maximumf>, %3, %cst [0] : vector<3x16x16xf32> to vector<16x16xf32>
    %5 = vector.shape_cast %4 : vector<16x16xf32> to vector<1x16x16xf32>
    %6 = vector.broadcast %5 : vector<1x16x16xf32> to vector<3x16x16xf32>
    %7 = arith.subf %3, %6 : vector<3x16x16xf32>
    %8 = math.exp %7 : vector<3x16x16xf32>
    %cst_6 = arith.constant dense<0.000000e+00> : vector<16x16xf32>
    %9 = vector.multi_reduction <add>, %8, %cst_6 [0] : vector<3x16x16xf32> to vector<16x16xf32>
    %10 = vector.shape_cast %9 : vector<16x16xf32> to vector<1x16x16xf32>
    %11 = vector.broadcast %10 : vector<1x16x16xf32> to vector<3x16x16xf32>
    %12 = arith.divf %8, %11 : vector<3x16x16xf32>
    %13 = arith.mulf %1, %12 : vector<3x16x16xf32>
    %cst_7 = arith.constant dense<0.000000e+00> : vector<16x16xf32>
    %14 = vector.multi_reduction <add>, %13, %cst_7 [0] : vector<3x16x16xf32> to vector<16x16xf32>
    %c0_8 = arith.constant 0 : index
    %c0_9 = arith.constant 0 : index
    %15 = vector.load %arg1[%c0_8, %c0_9] : memref<16x16xf32, #tpu.memory_space<vmem>>, vector<16x16xf32>
    %cst_10 = arith.constant dense<0.000000e+00> : vector<16x16xf32>
    %16 = tpu.matmul %14, %15, %cst_10 {dimension_numbers = #tpu.dot_dimension_numbers<[1], [0], [0], [1], [0, 0, 1, 1], [], []>} : vector<16x16xf32>, vector<16x16xf32>, vector<16x16xf32> -> vector<16x16xf32>
    %c0_11 = arith.constant 0 : index
    %c0_12 = arith.constant 0 : index
    %17 = vector.load %arg2[%c0_11, %c0_12] : memref<16x64xf32, #tpu.memory_space<vmem>>, vector<16x64xf32>
    %cst_13 = arith.constant dense<0.000000e+00> : vector<16x64xf32>
    %18 = tpu.matmul %16, %17, %cst_13 {dimension_numbers = #tpu.dot_dimension_numbers<[1], [0], [0], [1], [0, 0, 1, 1], [], []>} : vector<16x16xf32>, vector<16x64xf32>, vector<16x64xf32> -> vector<16x64xf32>
    %c0_14 = arith.constant 0 : index
    %c0_15 = arith.constant 0 : index
    %19 = vector.load %arg3[%c0_14, %c0_15] : memref<16x64xf32, #tpu.memory_space<vmem>>, vector<16x64xf32>
    tpu.vector_store %arg3[%c0_14, %c0_15], %18 {strides = array<i32>} : memref<16x64xf32, #tpu.memory_space<vmem>>, vector<16x64xf32>,
    return
  }
}

</mosaic_0001>

<llo_original>
// kernel: gcn_conv.1
$region0: #{gcn_conv.1}
  #allocation0 [shape = 'u32[]', space=smem, size = 0x4, offset = 0x4, fixed_abs, tag = 'smem constant byte address 0x4 - core index']
  #allocation1 [shape = 'u32[144,128]{1,0:T(1,128)}', space=vmem, size = 0x12000, scoped, tag = 'internal scratch']
  %s0 = inlined_call_operand.vmem [shape: f32[2,3,16,16], index: 0, kind: input, shape index: {}]
  %s1 = inlined_call_operand.vmem [shape: f32[16,16], index: 1, kind: input, shape index: {}]
  %s2 = inlined_call_operand.vmem [shape: f32[16,64], index: 2, kind: input, shape index: {}]
  %s3 = inlined_call_operand.vmem [shape: f32[16,64], index: 3, kind: output, shape index: {}]
  %s4 = sld [smem:[#allocation0]]
  $region22: #{gcn_conv.1} parent=0
    _
  %s6 = ssub.s32 1, %s4
  %s7 = scalar_select 0, %s6, %s4
  // Predicated region
  $region2: #{gcn_conv.1} parent=0 // pred_check
    _
  $region3: #{gcn_conv.1} parent=0 // pred_check_branch
    %9 = sbr.rel (0) target = $region5
  $region4: #{gcn_conv.1} parent=0 // pred_region
    _
  $region5: #{gcn_conv.1} parent=0 // pred_fallthru
    _
  // Predicated region
  $region6: #{gcn_conv.1} parent=0 // pred_check
    _
  $region7: #{gcn_conv.1} parent=0 // pred_check_branch
    %11 = sbr.rel (0) target = $region9
  $region8: #{gcn_conv.1} parent=0 // pred_region
    _
  $region9: #{gcn_conv.1} parent=0 // pred_fallthru
    _
  // Predicated region
  $region10: #{gcn_conv.1} parent=0 // pred_check
    _
  $region11: #{gcn_conv.1} parent=0 // pred_check_branch
    %13 = sbr.rel (0) target = $region13
  $region12: #{gcn_conv.1} parent=0 // pred_region
    _
  $region13: #{gcn_conv.1} parent=0 // pred_fallthru
    _
  %v14 = vld [vmem:[%s0] sm:$0xff]
  %v15 = vld [vmem:[%s0 + $0x8] sm:$0xff]
  %v16 = vld [vmem:[%s0 + $0x10] sm:$0xff]
  %v17 = vld [vmem:[%s0 + $0x18] sm:$0xff]
  %v18 = vld [vmem:[%s0 + $0x20] sm:$0xff]
  %v19 = vld [vmem:[%s0 + $0x28] sm:$0xff]
  %s20 = scalar_lea.vmem %s0, 48
  %v21 = vld [vmem:[%s20] sm:$0xff]
  %v22 = vld [vmem:[%s20 + $0x8] sm:$0xff]
  %v23 = vld [vmem:[%s20 + $0x10] sm:$0xff]
  %v24 = vld [vmem:[%s20 + $0x18] sm:$0xff]
  %v25 = vld [vmem:[%s20 + $0x20] sm:$0xff]
  %v26 = vld [vmem:[%s20 + $0x28] sm:$0xff]
  %vm27 = vcmask 130048
  %v28 = vsel %vm27, %v21, -inf
  %v29 = vsel %vm27, %v23, -inf
  %v30 = vsel %vm27, %v25, -inf
  %v31 = vmax.f32 %v28, %v30
  %v32 = vmax.f32 %v31, %v29
  %v33 = vsel %vm27, %v22, -inf
  %v34 = vsel %vm27, %v24, -inf
  %v35 = vsel %vm27, %v26, -inf
  %v36 = vmax.f32 %v33, %v35
  %v37 = vmax.f32 %v36, %v34
  %v38 = vsub.f32 %v21, %v32
  %v39 = vsub.f32 %v22, %v37
  %v40 = vsub.f32 %v23, %v32
  %v41 = vsub.f32 %v24, %v37
  %v42 = vsub.f32 %v25, %v32
  %v43 = vsub.f32 %v26, %v37
  %v44 = vmul.f32 %v38, 1.442695
  %v45 = vpow.pop %v44
  %v46 = vmul.f32 %v39, 1.442695
  %v47 = vpow.pop %v46
  %v48 = vmul.f32 %v40, 1.442695
  %v49 = vpow.pop %v48
  %v50 = vmul.f32 %v41, 1.442695
  %v51 = vpow.pop %v50
  %v52 = vmul.f32 %v42, 1.442695
  %v53 = vpow.pop %v52
  %v54 = vmul.f32 %v43, 1.442695
  %v55 = vpow.pop %v54
  %v56 = vsel %vm27, %v45, 0.0
  %v57 = vsel %vm27, %v49, 0.0
  %v58 = vadd.f32 %v56, %v57
  %v59 = vsel %vm27, %v53, 0.0
  %v60 = vadd.f32 %v58, %v59
  %v61 = vsel %vm27, %v47, 0.0
  %v62 = vsel %vm27, %v51, 0.0
  %v63 = vadd.f32 %v61, %v62
  %v64 = vsel %vm27, %v55, 0.0
  %v65 = vadd.f32 %v63, %v64
  %v66 = vrcp.pop %v60
  %v67 = vmul.f32 %v45, %v66
  %v68 = vrcp.pop %v65
  %v69 = vmul.f32 %v47, %v68
  %v70 = vmul.f32 %v49, %v66
  %v71 = vmul.f32 %v51, %v68
  %v72 = vmul.f32 %v53, %v66
  %v73 = vmul.f32 %v55, %v68
  %v74 = vmul.f32 %v14, %v67
  %v75 = vmul.f32 %v15, %v69
  %v76 = vmul.f32 %v16, %v70
  %v77 = vmul.f32 %v17, %v71
  %v78 = vmul.f32 %v18, %v72
  %v79 = vmul.f32 %v19, %v73
  %v80 = vsel %vm27, %v74, 0.0
  %v81 = vsel %vm27, %v76, 0.0
  %v82 = vadd.f32 %v80, %v81
  %v83 = vsel %vm27, %v78, 0.0
  %v84 = vadd.f32 %v82, %v83
  %v85 = vsel %vm27, %v75, 0.0
  %v86 = vsel %vm27, %v77, 0.0
  %v87 = vadd.f32 %v85, %v86
  %v88 = vsel %vm27, %v79, 0.0
  %v89 = vadd.f32 %v87, %v88
  %v90 = vld [vmem:[%s1] sm:$0xff]
  %v91 = vld [vmem:[%s1 + $0x8] sm:$0xff]
  %v93 = vsel %vm27, %v84, 0
  %v96 = vsel %vm27, %v89, 0
  %98 = vmatprep.subr.mxu0 0.0
  %99 = vmatpush1.msra.mxu0 %v90
  %100 = vmatprep.subr.mxu0 0.0
  %101 = vmatpush1.msra.mxu0 %v91
  %102 = vmatprep.subr.mxu0 0.0
  %103 = vmatpush1.msra.mxu0 0.0
  %104 = vmatprep.subr.mxu0 0.0
  %105 = vmatpush1.msra.mxu0 0.0
  %106 = vmatprep.subr.mxu0 0.0
  %107 = vmatpush1.msra.mxu0 0.0
  %108 = vmatprep.subr.mxu0 0.0
  %109 = vmatpush1.msra.mxu0 0.0
  %110 = vmatprep.subr.mxu0 0.0
  %111 = vmatpush1.msra.mxu0 0.0
  %112 = vmatprep.subr.mxu0 0.0
  %113 = vmatpush1.msra.mxu0 0.0
  %114 = vmatprep.subr.mxu0 0.0
  %115 = vmatpush1.msra.mxu0 0.0
  %116 = vmatprep.subr.mxu0 0.0
  %117 = vmatpush1.msra.mxu0 0.0
  %118 = vmatprep.subr.mxu0 0.0
  %119 = vmatpush1.msra.mxu0 0.0
  %120 = vmatprep.subr.mxu0 0.0
  %121 = vmatpush1.msra.mxu0 0.0
  %122 = vmatprep.subr.mxu0 0.0
  %123 = vmatpush1.msra.mxu0 0.0
  %124 = vmatprep.subr.mxu0 0.0
  %125 = vmatpush1.msra.mxu0 0.0
  %126 = vmatprep.subr.mxu0 0.0
  %127 = vmatpush1.msra.mxu0 0.0
  %128 = vmatprep.subr.mxu0 0.0
  %129 = vmatpush1.msra.mxu0 0.0
  %130 = vmatprep.subr.mxu0 0.0
  %131 = vmatpush1.msra.mxu0 0.0
  %132 = vmatprep.subr.mxu0 0.0
  %133 = vmatpush1.msra.mxu0 0.0
  %134 = vmatprep.subr.mxu0 0.0
  %135 = vmatpush1.msra.mxu0 0.0
  %136 = vmatprep.subr.mxu0 0.0
  %137 = vmatpush1.msra.mxu0 0.0
  %138 = vmatprep.subr.mxu0 0.0
  %139 = vmatpush1.msra.mxu0 0.0
  %140 = vmatprep.subr.mxu0 0.0
  %141 = vmatpush1.msra.mxu0 0.0
  %142 = vmatprep.subr.mxu0 0.0
  %143 = vmatpush1.msra.mxu0 0.0
  %144 = vmatprep.subr.mxu0 0.0
  %145 = vmatpush1.msra.mxu0 0.0
  %146 = vmatprep.subr.mxu0 0.0
  %147 = vmatpush1.msra.mxu0 0.0
  %148 = vmatprep.subr.mxu0 0.0
  %149 = vmatpush1.msra.mxu0 0.0
  %150 = vmatprep.subr.mxu0 0.0
  %151 = vmatpush1.msra.mxu0 0.0
  %152 = vmatprep.subr.mxu0 0.0
  %153 = vmatpush1.msra.mxu0 0.0
  %154 = vmatprep.subr.mxu0 0.0
  %155 = vmatpush1.msra.mxu0 0.0
  %156 = vmatprep.subr.mxu0 0.0
  %157 = vmatpush1.msra.mxu0 0.0
  %158 = vmatprep.subr.mxu0 0.0
  %159 = vmatpush1.msra.mxu0 0.0
  %160 = vmatprep.subr.mxu0 0.0
  %161 = vmatpush1.msra.mxu0 0.0
  %162 = vmatprep.mubr.f32.mxu0 0.0
  %163 = vmatmul.mubr.f32.gmra.mrb[0].mxu0 %v93
  %v164 = vpop.f32.mrb[0].mxu0
  %v165 = vadd.f32 0.0, %v164
  %v166 = vpop.f32.mrb[0].mxu0
  %167 = vmatprep.mubr.f32.mxu0 0.0
  %168 = vmatmul.mubr.f32.gmra.mrb[0].mxu0 %v96
  %v169 = vpop.f32.mrb[0].mxu0
  %v170 = vadd.f32 0.0, %v169
  %v171 = vpop.f32.mrb[0].mxu0
  %172 = vdwg.mxu0
  %v173 = vld [vmem:[%s2] sm:$0xff]
  %v174 = vld [vmem:[%s2 + $0x8] sm:$0xff]
  %v176 = vsel %vm27, %v165, 0
  %v179 = vsel %vm27, %v170, 0
  %181 = vmatprep.subr.mxu0 0.0
  %182 = vmatpush1.msra.mxu0 %v173
  %183 = vmatprep.subr.mxu0 0.0
  %184 = vmatpush1.msra.mxu0 %v174
  %185 = vmatprep.subr.mxu0 0.0
  %186 = vmatpush1.msra.mxu0 0.0
  %187 = vmatprep.subr.mxu0 0.0
  %188 = vmatpush1.msra.mxu0 0.0
  %189 = vmatprep.subr.mxu0 0.0
  %190 = vmatpush1.msra.mxu0 0.0
  %191 = vmatprep.subr.mxu0 0.0
  %192 = vmatpush1.msra.mxu0 0.0
  %193 = vmatprep.subr.mxu0 0.0
  %194 = vmatpush1.msra.mxu0 0.0
  %195 = vmatprep.subr.mxu0 0.0
  %196 = vmatpush1.msra.mxu0 0.0
  %197 = vmatprep.subr.mxu0 0.0
  %198 = vmatpush1.msra.mxu0 0.0
  %199 = vmatprep.subr.mxu0 0.0
  %200 = vmatpush1.msra.mxu0 0.0
  %201 = vmatprep.subr.mxu0 0.0
  %202 = vmatpush1.msra.mxu0 0.0
  %203 = vmatprep.subr.mxu0 0.0
  %204 = vmatpush1.msra.mxu0 0.0
  %205 = vmatprep.subr.mxu0 0.0
  %206 = vmatpush1.msra.mxu0 0.0
  %207 = vmatprep.subr.mxu0 0.0
  %208 = vmatpush1.msra.mxu0 0.0
  %209 = vmatprep.subr.mxu0 0.0
  %210 = vmatpush1.msra.mxu0 0.0
  %211 = vmatprep.subr.mxu0 0.0
  %212 = vmatpush1.msra.mxu0 0.0
  %213 = vmatprep.subr.mxu0 0.0
  %214 = vmatpush1.msra.mxu0 0.0
  %215 = vmatprep.subr.mxu0 0.0
  %216 = vmatpush1.msra.mxu0 0.0
  %217 = vmatprep.subr.mxu0 0.0
  %218 = vmatpush1.msra.mxu0 0.0
  %219 = vmatprep.subr.mxu0 0.0
  %220 = vmatpush1.msra.mxu0 0.0
  %221 = vmatprep.subr.mxu0 0.0
  %222 = vmatpush1.msra.mxu0 0.0
  %223 = vmatprep.subr.mxu0 0.0
  %224 = vmatpush1.msra.mxu0 0.0
  %225 = vmatprep.subr.mxu0 0.0
  %226 = vmatpush1.msra.mxu0 0.0
  %227 = vmatprep.subr.mxu0 0.0
  %228 = vmatpush1.msra.mxu0 0.0
  %229 = vmatprep.subr.mxu0 0.0
  %230 = vmatpush1.msra.mxu0 0.0
  %231 = vmatprep.subr.mxu0 0.0
  %232 = vmatpush1.msra.mxu0 0.0
  %233 = vmatprep.subr.mxu0 0.0
  %234 = vmatpush1.msra.mxu0 0.0
  %235 = vmatprep.subr.mxu0 0.0
  %236 = vmatpush1.msra.mxu0 0.0
  %237 = vmatprep.subr.mxu0 0.0
  %238 = vmatpush1.msra.mxu0 0.0
  %239 = vmatprep.subr.mxu0 0.0
  %240 = vmatpush1.msra.mxu0 0.0
  %241 = vmatprep.subr.mxu0 0.0
  %242 = vmatpush1.msra.mxu0 0.0
  %243 = vmatprep.subr.mxu0 0.0
  %244 = vmatpush1.msra.mxu0 0.0
  %245 = vmatprep.mubr.f32.mxu0 0.0
  %246 = vmatmul.mubr.f32.gmra.mrb[0].mxu0 %v176
  %v247 = vpop.f32.mrb[0].mxu0
  %v248 = vadd.f32 0.0, %v247
  %v249 = vpop.f32.mrb[0].mxu0
  %250 = vmatprep.mubr.f32.mxu0 0.0
  %251 = vmatmul.mubr.f32.gmra.mrb[0].mxu0 %v179
  %v252 = vpop.f32.mrb[0].mxu0
  %v253 = vadd.f32 0.0, %v252
  %v254 = vpop.f32.mrb[0].mxu0
  %255 = vdwg.mxu0
  %vm256 = vcmask 523264
  %257 = vst.msk [vmem:[%s3] sm:$0xff] %vm256, %v248
  %258 = vst.msk [vmem:[%s3 + $0x8] sm:$0xff] %vm256, %v253
  // Predicated region
  $region14: #{gcn_conv.1} parent=0 // pred_check
    _
  $region15: #{gcn_conv.1} parent=0 // pred_check_branch
    %260 = sbr.rel (0) target = $region17
  $region16: #{gcn_conv.1} parent=0 // pred_region
    _
  $region17: #{gcn_conv.1} parent=0 // pred_fallthru
    _
  // Predicated region
  $region18: #{gcn_conv.1} parent=0 // pred_check
    _
  $region19: #{gcn_conv.1} parent=0 // pred_check_branch
    %262 = sbr.rel (0) target = $region21
  $region20: #{gcn_conv.1} parent=0 // pred_region
    _
  $region21: #{gcn_conv.1} parent=0 // pred_fallthru
    _

</llo_original>
